<compile_context>
chip_gen: v7x
topology: tpu7x:2x2x1
jax: 0.10.0
libtpu: 0.0.40
codegen_flags: <defaults>
</compile_context>

<pallas_src>
import functools

import jax
import jax.numpy as jnp
from jax import lax
from jax.experimental import pallas as pl
from jax.experimental.pallas import tpu as pltpu

IN_DIM = 129
H1, H2, H3, OUT_DIM = 64, 64, 32, 16
SUB_ROWS = 256              # in-kernel sub-tile: activations stay in vregs
MAX_BLOCK_ROWS = 4096       # per-grid-step row tile
VMEM_LIMIT_BYTES = 48 * 1024 * 1024   # < v7x's 64 MiB physical, >> tile needs


def _round_up(n, m):
    return ((n + m - 1) // m) * m


def _choose_tiles(batch):
    """Pick (row_tile, sub_tile). row_tile is a multiple of sub_tile."""
    batch = max(int(batch), 1)
    if batch <= SUB_ROWS:
        # Single small tile; block rows == full dim keeps the BlockSpec legal
        # even when batch is not a multiple of 8.
        return batch, batch
    # Aim for >= 2 grid steps so v7x's two TensorCores both get work; cap the
    # tile so double-buffered input/output stays well inside VMEM budgets.
    target = _round_up(pl.cdiv(batch, 2), SUB_ROWS)
    tb = min(MAX_BLOCK_ROWS, target)
    return tb, SUB_ROWS


def dqn_kernel(x_ref,
               w1m_ref, w1l_ref, b1_ref,
               w2_ref, b2_ref,
               w3_ref, b3_ref,
               w4_ref, b4_ref,
               o_ref, *, sub_rows):
    # Parameters are tiny; constant index_map keeps them VMEM-resident across
    # the whole grid.
    w1m = w1m_ref[...]              # (128, 64) f32 -> MXU part of layer 1
    w1l = w1l_ref[...]              # (1, 64)   f32 -> rank-1 fixup (feature 129)
    b1 = b1_ref[...]
    w2 = w2_ref[...]
    b2 = b2_ref[...]
    w3 = w3_ref[...]
    b3 = b3_ref[...]
    w4 = w4_ref[...]                # (32, 16) f32
    b4 = b4_ref[...]                # (1, 16)  f32

    n_sub = x_ref.shape[0] // sub_rows   # compile-time constant

    def body(s, carry):
        r = pl.multiple_of(s * sub_rows, sub_rows)
        xm = x_ref[pl.ds(r, sub_rows), pl.ds(0, 128)]    # (sub, 128) f32
        xl = x_ref[pl.ds(r, sub_rows), pl.ds(128, 1)]    # (sub, 1)   f32

        # Layer 1: K=128 MXU matmul + rank-1 VPU update for the 129th feature.
        h = jnp.dot(xm, w1m, preferred_element_type=jnp.float32)
        h = jnp.maximum(h + xl * w1l + b1, 0.0)

        h = jnp.maximum(
            jnp.dot(h, w2, preferred_element_type=jnp.float32) + b2, 0.0)
        h = jnp.maximum(
            jnp.dot(h, w3, preferred_element_type=jnp.float32) + b3, 0.0)
        h = jnp.dot(h, w4, preferred_element_type=jnp.float32) + b4

        o_ref[pl.ds(r, sub_rows), :] = h                 # (sub, 16) f32 store
        return carry

    # Fully unrolled: gives the LLO scheduler cross-iteration visibility.
    lax.fori_loop(0, n_sub, body, 0, unroll=True)


def pack_params(params):
    """One-time parameter packing (f32, layer-1 K split). Call once, reuse."""
    f32 = jnp.float32
    w1 = jnp.asarray(params["w1"], f32)                     # (129, 64), (in,out)
    return (
        w1[:128, :],                                        # MXU part of layer 1
        w1[128:129, :],                                      # rank-1 fixup row
        jnp.asarray(params["b1"], f32).reshape(1, H1),
        jnp.asarray(params["w2"], f32),
        jnp.asarray(params["b2"], f32).reshape(1, H2),
        jnp.asarray(params["w3"], f32),
        jnp.asarray(params["b3"], f32).reshape(1, H3),
        jnp.asarray(params["w4"], f32),
        jnp.asarray(params["b4"], f32).reshape(1, OUT_DIM),
    )


def deep_q_network_forward(x, packed):
    """x: (B, 129) float32.  packed: output of pack_params()."""
    if x.dtype != jnp.float32:
        x = x.astype(jnp.float32)
    B = x.shape[0]
    tb, sub = _choose_tiles(B)
    n_blocks = pl.cdiv(B, tb)   # ragged tail handled by Pallas partial blocks

    in_specs = [pl.BlockSpec((tb, IN_DIM), lambda i: (i, 0))]
    in_specs += [pl.BlockSpec(w.shape, lambda i: (0, 0)) for w in packed]

    flops = 2 * B * (IN_DIM * H1 + H1 * H2 + H2 * H3 + H3 * OUT_DIM)
    bytes_accessed = (B * IN_DIM * 4                       # x read
                      + B * OUT_DIM * 4                    # output write
                      + sum(int(w.size) * 4 for w in packed))

    out = pl.pallas_call(
        functools.partial(dqn_kernel, sub_rows=sub),
        out_shape=jax.ShapeDtypeStruct((B, OUT_DIM), jnp.float32),
        grid=(n_blocks,),
        in_specs=in_specs,
        out_specs=pl.BlockSpec((tb, OUT_DIM), lambda i: (i, 0)),
        compiler_params=pltpu.CompilerParams(
            dimension_semantics=("parallel",),
            vmem_limit_bytes=VMEM_LIMIT_BYTES),
        cost_estimate=pl.CostEstimate(
            flops=flops, transcendentals=0, bytes_accessed=bytes_accessed),
    )(x, *packed)

    return out


def init_params(key):
    """Deterministic init mirroring nn.Linear (stored pre-transposed (in,out))."""
    dims = [(IN_DIM, H1), (H1, H2), (H2, H3), (H3, OUT_DIM)]
    params = {}
    for i, (fan_in, fan_out) in enumerate(dims, start=1):
        key, kw, kb = jax.random.split(key, 3)
        bound = 1.0 / jnp.sqrt(fan_in)
        # PyTorch Linear weight is (out, in); we store transposed (in, out).
        params[f"w{i}"] = jax.random.uniform(
            kw, (fan_in, fan_out), jnp.float32, -bound, bound)
        params[f"b{i}"] = jax.random.uniform(
            kb, (1, fan_out), jnp.float32, -bound, bound)
    return params


def _reference(x, params):
    h = x
    for i in range(1, 5):
        h = h @ params[f"w{i}"] + params[f"b{i}"]
        if i < 4:
            h = jnp.maximum(h, 0.0)
    return h


if __name__ == "__main__":
    key = jax.random.PRNGKey(0)
    kx, kx2, kp = jax.random.split(key, 3)

    params = init_params(kp)
    packed = pack_params(params)

    # Small batch: single grid step, tile == batch.
    B = 2
    x = jax.random.normal(kx, (B, IN_DIM), jnp.float32)
    out = jax.block_until_ready(deep_q_network_forward(x, packed))
    assert out.shape == (B, OUT_DIM)
    ref = _reference(x, params)
    assert jnp.allclose(out, ref, atol=1e-2, rtol=1e-2), \
        float(jnp.max(jnp.abs(out - ref)))

    # Ragged batch: 2 grid steps, partial last block (no wrapper-side padding;
    # out-of-bounds rows of the last block are dropped by the writeback DMA).
    B2 = 300
    x2 = jax.random.normal(kx2, (B2, IN_DIM), jnp.float32)
    out2 = jax.block_until_ready(deep_q_network_forward(x2, packed))
    assert out2.shape == (B2, OUT_DIM)
    ref2 = _reference(x2, params)
    assert jnp.allclose(out2, ref2, atol=1e-2, rtol=1e-2), \
        float(jnp.max(jnp.abs(out2 - ref2)))

    print("KERNEL_OK")
</pallas_src>

<mosaic_0001>
module attributes {stable_mosaic.version = 11 : i64} {
  func.func @dqn_kernel(%arg0: i32, %arg1: memref<2x129xf32, #tpu.memory_space<vmem>>, %arg2: memref<128x64xf32, #tpu.memory_space<vmem>>, %arg3: memref<1x64xf32, #tpu.memory_space<vmem>>, %arg4: memref<1x64xf32, #tpu.memory_space<vmem>>, %arg5: memref<64x64xf32, #tpu.memory_space<vmem>>, %arg6: memref<1x64xf32, #tpu.memory_space<vmem>>, %arg7: memref<64x32xf32, #tpu.memory_space<vmem>>, %arg8: memref<1x32xf32, #tpu.memory_space<vmem>>, %arg9: memref<32x16xf32, #tpu.memory_space<vmem>>, %arg10: memref<1x16xf32, #tpu.memory_space<vmem>>, %arg11: memref<2x16xf32, #tpu.memory_space<vmem>>) attributes {dimension_semantics = [#tpu.dimension_semantics<parallel>], iteration_bounds = array<i64: 1>, scalar_prefetch = 0 : i64, scratch_operands = 0 : i64, tpu.core_type = #tpu.core_type<tc>, window_params = [{transform_indices = @transform_0, window_bounds = array<i64: 2, 129>}, {pipeline_mode = #tpu.pipeline_mode<synchronous>, transform_indices = @transform_1, window_bounds = array<i64: 128, 64>}, {pipeline_mode = #tpu.pipeline_mode<synchronous>, transform_indices = @transform_2, window_bounds = array<i64: 1, 64>}, {pipeline_mode = #tpu.pipeline_mode<synchronous>, transform_indices = @transform_3, window_bounds = array<i64: 1, 64>}, {pipeline_mode = #tpu.pipeline_mode<synchronous>, transform_indices = @transform_4, window_bounds = array<i64: 64, 64>}, {pipeline_mode = #tpu.pipeline_mode<synchronous>, transform_indices = @transform_5, window_bounds = array<i64: 1, 64>}, {pipeline_mode = #tpu.pipeline_mode<synchronous>, transform_indices = @transform_6, window_bounds = array<i64: 64, 32>}, {pipeline_mode = #tpu.pipeline_mode<synchronous>, transform_indices = @transform_7, window_bounds = array<i64: 1, 32>}, {pipeline_mode = #tpu.pipeline_mode<synchronous>, transform_indices = @transform_8, window_bounds = array<i64: 32, 16>}, {pipeline_mode = #tpu.pipeline_mode<synchronous>, transform_indices = @transform_9, window_bounds = array<i64: 1, 16>}, {transform_indices = @transform_10, window_bounds = array<i64: 2, 16>}]} {
    %c0 = arith.constant 0 : index
    %c0_0 = arith.constant 0 : index
    %0 = vector.load %arg2[%c0, %c0_0] : memref<128x64xf32, #tpu.memory_space<vmem>>, vector<128x64xf32>
    %c0_1 = arith.constant 0 : index
    %c0_2 = arith.constant 0 : index
    %1 = vector.load %arg3[%c0_1, %c0_2] : memref<1x64xf32, #tpu.memory_space<vmem>>, vector<1x64xf32>
    %c0_3 = arith.constant 0 : index
    %c0_4 = arith.constant 0 : index
    %2 = vector.load %arg4[%c0_3, %c0_4] : memref<1x64xf32, #tpu.memory_space<vmem>>, vector<1x64xf32>
    %c0_5 = arith.constant 0 : index
    %c0_6 = arith.constant 0 : index
    %3 = vector.load %arg5[%c0_5, %c0_6] : memref<64x64xf32, #tpu.memory_space<vmem>>, vector<64x64xf32>
    %c0_7 = arith.constant 0 : index
    %c0_8 = arith.constant 0 : index
    %4 = vector.load %arg6[%c0_7, %c0_8] : memref<1x64xf32, #tpu.memory_space<vmem>>, vector<1x64xf32>
    %c0_9 = arith.constant 0 : index
    %c0_10 = arith.constant 0 : index
    %5 = vector.load %arg7[%c0_9, %c0_10] : memref<64x32xf32, #tpu.memory_space<vmem>>, vector<64x32xf32>
    %c0_11 = arith.constant 0 : index
    %c0_12 = arith.constant 0 : index
    %6 = vector.load %arg8[%c0_11, %c0_12] : memref<1x32xf32, #tpu.memory_space<vmem>>, vector<1x32xf32>
    %c0_13 = arith.constant 0 : index
    %c0_14 = arith.constant 0 : index
    %7 = vector.load %arg9[%c0_13, %c0_14] : memref<32x16xf32, #tpu.memory_space<vmem>>, vector<32x16xf32>
    %c0_15 = arith.constant 0 : index
    %c0_16 = arith.constant 0 : index
    %8 = vector.load %arg10[%c0_15, %c0_16] : memref<1x16xf32, #tpu.memory_space<vmem>>, vector<1x16xf32>
    %c0_i32 = arith.constant 0 : i32
    %c2_i32 = arith.constant 2 : i32
    %9 = arith.muli %c0_i32, %c2_i32 : i32
    %10 = tpu.assume_multiple %9, 2 : i32
    %11 = arith.index_cast %10 : i32 to index
    %c0_17 = arith.constant 0 : index
    %12 = vector.load %arg1[%11, %c0_17] : memref<2x129xf32, #tpu.memory_space<vmem>>, vector<2x128xf32>
    %13 = arith.index_cast %10 : i32 to index
    %c128 = arith.constant 128 : index
    %14 = vector.load %arg1[%13, %c128] : memref<2x129xf32, #tpu.memory_space<vmem>>, vector<2x1xf32>
    %cst = arith.constant dense<0.000000e+00> : vector<2x64xf32>
    %15 = tpu.matmul %12, %0, %cst {dimension_numbers = #tpu.dot_dimension_numbers<[1], [0], [0], [1], [0, 0, 1, 1], [], []>} : vector<2x128xf32>, vector<128x64xf32>, vector<2x64xf32> -> vector<2x64xf32>
    %16 = vector.broadcast %14 : vector<2x1xf32> to vector<2x64xf32>
    %17 = vector.broadcast %1 : vector<1x64xf32> to vector<2x64xf32>
    %18 = arith.mulf %16, %17 : vector<2x64xf32>
    %19 = arith.addf %15, %18 : vector<2x64xf32>
    %20 = vector.broadcast %2 : vector<1x64xf32> to vector<2x64xf32>
    %21 = arith.addf %19, %20 : vector<2x64xf32>
    %cst_18 = arith.constant 0.000000e+00 : f32
    %22 = vector.broadcast %cst_18 : f32 to vector<2x64xf32>
    %23 = arith.maximumf %21, %22 : vector<2x64xf32>
    %cst_19 = arith.constant dense<0.000000e+00> : vector<2x64xf32>
    %24 = tpu.matmul %23, %3, %cst_19 {dimension_numbers = #tpu.dot_dimension_numbers<[1], [0], [0], [1], [0, 0, 1, 1], [], []>} : vector<2x64xf32>, vector<64x64xf32>, vector<2x64xf32> -> vector<2x64xf32>
    %25 = vector.broadcast %4 : vector<1x64xf32> to vector<2x64xf32>
    %26 = arith.addf %24, %25 : vector<2x64xf32>
    %cst_20 = arith.constant 0.000000e+00 : f32
    %27 = vector.broadcast %cst_20 : f32 to vector<2x64xf32>
    %28 = arith.maximumf %26, %27 : vector<2x64xf32>
    %cst_21 = arith.constant dense<0.000000e+00> : vector<2x32xf32>
    %29 = tpu.matmul %28, %5, %cst_21 {dimension_numbers = #tpu.dot_dimension_numbers<[1], [0], [0], [1], [0, 0, 1, 1], [], []>} : vector<2x64xf32>, vector<64x32xf32>, vector<2x32xf32> -> vector<2x32xf32>
    %30 = vector.broadcast %6 : vector<1x32xf32> to vector<2x32xf32>
    %31 = arith.addf %29, %30 : vector<2x32xf32>
    %cst_22 = arith.constant 0.000000e+00 : f32
    %32 = vector.broadcast %cst_22 : f32 to vector<2x32xf32>
    %33 = arith.maximumf %31, %32 : vector<2x32xf32>
    %cst_23 = arith.constant dense<0.000000e+00> : vector<2x16xf32>
    %34 = tpu.matmul %33, %7, %cst_23 {dimension_numbers = #tpu.dot_dimension_numbers<[1], [0], [0], [1], [0, 0, 1, 1], [], []>} : vector<2x32xf32>, vector<32x16xf32>, vector<2x16xf32> -> vector<2x16xf32>
    %35 = vector.broadcast %8 : vector<1x16xf32> to vector<2x16xf32>
    %36 = arith.addf %34, %35 : vector<2x16xf32>
    %37 = arith.index_cast %10 : i32 to index
    %c0_24 = arith.constant 0 : index
    %38 = vector.load %arg11[%37, %c0_24] : memref<2x16xf32, #tpu.memory_space<vmem>>, vector<2x16xf32>
    tpu.vector_store %arg11[%37, %c0_24], %36 {strides = array<i32>} : memref<2x16xf32, #tpu.memory_space<vmem>>, vector<2x16xf32>,
    %c1_i32 = arith.constant 1 : i32
    return
  }
  func.func @transform_0(%arg0: i32) -> (i32, i32) {
    %c0_i32 = arith.constant 0 : i32
    %c0_i32_0 = arith.constant 0 : i32
    return %arg0, %c0_i32 : i32, i32
  }
  func.func @transform_1(%arg0: i32) -> (i32, i32) {
    %c0_i32 = arith.constant 0 : i32
    %c0_i32_0 = arith.constant 0 : i32
    %c0_i32_1 = arith.constant 0 : i32
    return %c0_i32, %c0_i32_0 : i32, i32
  }
  func.func @transform_2(%arg0: i32) -> (i32, i32) {
    %c0_i32 = arith.constant 0 : i32
    %c0_i32_0 = arith.constant 0 : i32
    %c0_i32_1 = arith.constant 0 : i32
    return %c0_i32, %c0_i32_0 : i32, i32
  }
  func.func @transform_3(%arg0: i32) -> (i32, i32) {
    %c0_i32 = arith.constant 0 : i32
    %c0_i32_0 = arith.constant 0 : i32
    %c0_i32_1 = arith.constant 0 : i32
    return %c0_i32, %c0_i32_0 : i32, i32
  }
  func.func @transform_4(%arg0: i32) -> (i32, i32) {
    %c0_i32 = arith.constant 0 : i32
    %c0_i32_0 = arith.constant 0 : i32
    %c0_i32_1 = arith.constant 0 : i32
    return %c0_i32, %c0_i32_0 : i32, i32
  }
  func.func @transform_5(%arg0: i32) -> (i32, i32) {
    %c0_i32 = arith.constant 0 : i32
    %c0_i32_0 = arith.constant 0 : i32
    %c0_i32_1 = arith.constant 0 : i32
    return %c0_i32, %c0_i32_0 : i32, i32
  }
  func.func @transform_6(%arg0: i32) -> (i32, i32) {
    %c0_i32 = arith.constant 0 : i32
    %c0_i32_0 = arith.constant 0 : i32
    %c0_i32_1 = arith.constant 0 : i32
    return %c0_i32, %c0_i32_0 : i32, i32
  }
  func.func @transform_7(%arg0: i32) -> (i32, i32) {
    %c0_i32 = arith.constant 0 : i32
    %c0_i32_0 = arith.constant 0 : i32
    %c0_i32_1 = arith.constant 0 : i32
    return %c0_i32, %c0_i32_0 : i32, i32
  }
  func.func @transform_8(%arg0: i32) -> (i32, i32) {
    %c0_i32 = arith.constant 0 : i32
    %c0_i32_0 = arith.constant 0 : i32
    %c0_i32_1 = arith.constant 0 : i32
    return %c0_i32, %c0_i32_0 : i32, i32
  }
  func.func @transform_9(%arg0: i32) -> (i32, i32) {
    %c0_i32 = arith.constant 0 : i32
    %c0_i32_0 = arith.constant 0 : i32
    %c0_i32_1 = arith.constant 0 : i32
    return %c0_i32, %c0_i32_0 : i32, i32
  }
  func.func @transform_10(%arg0: i32) -> (i32, i32) {
    %c0_i32 = arith.constant 0 : i32
    %c0_i32_0 = arith.constant 0 : i32
    return %arg0, %c0_i32 : i32, i32
  }
}

</mosaic_0001>

<llo_original>
// kernel: tpu_custom_call.1
$region0: #{tpu_custom_call.1}
  #allocation0 [shape = 'u32[]', space=smem, size = 0x4, offset = 0x4, fixed_abs, tag = 'smem constant byte address 0x4 - core index']
  #allocation1 [shape = 'u32[144,128]{1,0:T(1,128)}', space=vmem, size = 0x12000, scoped, tag = 'internal scratch']
  %s0 = inlined_call_operand.vmem [shape: f32[2,129], index: 0, kind: input, shape index: {}]
  %s1 = inlined_call_operand.vmem [shape: f32[128,64], index: 1, kind: input, shape index: {}]
  %s2 = inlined_call_operand.vmem [shape: f32[1,64], index: 2, kind: input, shape index: {}]
  %s3 = inlined_call_operand.vmem [shape: f32[1,64], index: 3, kind: input, shape index: {}]
  %s4 = inlined_call_operand.vmem [shape: f32[64,64], index: 4, kind: input, shape index: {}]
  %s5 = inlined_call_operand.vmem [shape: f32[1,64], index: 5, kind: input, shape index: {}]
  %s6 = inlined_call_operand.vmem [shape: f32[64,32], index: 6, kind: input, shape index: {}]
  %s7 = inlined_call_operand.vmem [shape: f32[1,32], index: 7, kind: input, shape index: {}]
  %s8 = inlined_call_operand.vmem [shape: f32[32,16], index: 8, kind: input, shape index: {}]
  %s9 = inlined_call_operand.vmem [shape: f32[1,16], index: 9, kind: input, shape index: {}]
  %s10 = inlined_call_operand.hbm [shape: f32[2,16], index: 10, kind: output, shape index: {}]
  %s11 = sld [smem:[#allocation0]]
  $region50: #{tpu_custom_call.1} parent=0
    _
  %s13 = ssub.s32 1, %s11
  %s14 = scalar_select 0, %s13, %s11
  $region1: #{tpu_custom_call.1} parent=0
    #allocation2 [shape = 'u8[1024]{0}', space=vmem, size = 0x400, scoped, tag = 'output window, operand 0, single buffered']
    #allocation3 [shape = 's32[1]{0}', space=sflag, size = 0x4, scoped, tag = 'scoped memory for tpu_custom_call.1']
    %15 = vsyncpa [#allocation3], 0
    // Predicated region
    $region2: #{tpu_custom_call.1} parent=1 // pred_check
      _
    $region3: #{tpu_custom_call.1} parent=1 // pred_check_branch
      %17 = sbr.rel (0) target = $region5
    $region4: #{tpu_custom_call.1} parent=1 // pred_region
      _
    $region5: #{tpu_custom_call.1} parent=1 // pred_fallthru
      _
    // Predicated region
    $region6: #{tpu_custom_call.1} parent=1 // pred_check
      _
    $region7: #{tpu_custom_call.1} parent=1 // pred_check_branch
      %19 = sbr.rel (0) target = $region9
    $region8: #{tpu_custom_call.1} parent=1 // pred_region
      _
    $region9: #{tpu_custom_call.1} parent=1 // pred_fallthru
      _
    // Predicated region
    $region10: #{tpu_custom_call.1} parent=1 // pred_check
      _
    $region11: #{tpu_custom_call.1} parent=1 // pred_check_branch
      %21 = sbr.rel (0) target = $region13
    $region12: #{tpu_custom_call.1} parent=1 // pred_region
      _
    $region13: #{tpu_custom_call.1} parent=1 // pred_fallthru
      _
    // Predicated region
    $region14: #{tpu_custom_call.1} parent=1 // pred_check
      _
    $region15: #{tpu_custom_call.1} parent=1 // pred_check_branch
      %23 = sbr.rel (0) target = $region17
    $region16: #{tpu_custom_call.1} parent=1 // pred_region
      _
    $region17: #{tpu_custom_call.1} parent=1 // pred_fallthru
      _
    // Predicated region
    $region18: #{tpu_custom_call.1} parent=1 // pred_check
      _
    $region19: #{tpu_custom_call.1} parent=1 // pred_check_branch
      %25 = sbr.rel (0) target = $region21
    $region20: #{tpu_custom_call.1} parent=1 // pred_region
      _
    $region21: #{tpu_custom_call.1} parent=1 // pred_fallthru
      _
    // Predicated region
    $region22: #{tpu_custom_call.1} parent=1 // pred_check
      _
    $region23: #{tpu_custom_call.1} parent=1 // pred_check_branch
      %27 = sbr.rel (0) target = $region25
    $region24: #{tpu_custom_call.1} parent=1 // pred_region
      _
    $region25: #{tpu_custom_call.1} parent=1 // pred_fallthru
      _
    // Predicated region
    $region26: #{tpu_custom_call.1} parent=1 // pred_check
      _
    $region27: #{tpu_custom_call.1} parent=1 // pred_check_branch
      %29 = sbr.rel (0) target = $region29
    $region28: #{tpu_custom_call.1} parent=1 // pred_region
      _
    $region29: #{tpu_custom_call.1} parent=1 // pred_fallthru
      _
    // Predicated region
    $region30: #{tpu_custom_call.1} parent=1 // pred_check
      _
    $region31: #{tpu_custom_call.1} parent=1 // pred_check_branch
      %31 = sbr.rel (0) target = $region33
    $region32: #{tpu_custom_call.1} parent=1 // pred_region
      _
    $region33: #{tpu_custom_call.1} parent=1 // pred_fallthru
      _
    // Predicated region
    $region34: #{tpu_custom_call.1} parent=1 // pred_check
      _
    $region35: #{tpu_custom_call.1} parent=1 // pred_check_branch
      %33 = sbr.rel (0) target = $region37
    $region36: #{tpu_custom_call.1} parent=1 // pred_region
      _
    $region37: #{tpu_custom_call.1} parent=1 // pred_fallthru
      _
    // Predicated region
    $region38: #{tpu_custom_call.1} parent=1 // pred_check
      _
    $region39: #{tpu_custom_call.1} parent=1 // pred_check_branch
      %35 = sbr.rel (0) target = $region41
    $region40: #{tpu_custom_call.1} parent=1 // pred_region
      _
    $region41: #{tpu_custom_call.1} parent=1 // pred_fallthru
      _
    %v36 = vld [vmem:[%s1] sm:$0xff]
    %v37 = vld [vmem:[%s1 + $0x8] sm:$0xff]
    %v38 = vld [vmem:[%s1 + $0x10] sm:$0xff]
    %v39 = vld [vmem:[%s1 + $0x18] sm:$0xff]
    %v40 = vld [vmem:[%s1 + $0x20] sm:$0xff]
    %v41 = vld [vmem:[%s1 + $0x28] sm:$0xff]
    %v42 = vld [vmem:[%s1 + $0x30] sm:$0xff]
    %v43 = vld [vmem:[%s1 + $0x38] sm:$0xff]
    %v44 = vld [vmem:[%s1 + $0x40] sm:$0xff]
    %v45 = vld [vmem:[%s1 + $0x48] sm:$0xff]
    %v46 = vld [vmem:[%s1 + $0x50] sm:$0xff]
    %v47 = vld [vmem:[%s1 + $0x58] sm:$0xff]
    %v48 = vld [vmem:[%s1 + $0x60] sm:$0xff]
    %v49 = vld [vmem:[%s1 + $0x68] sm:$0xff]
    %v50 = vld [vmem:[%s1 + $0x70] sm:$0xff]
    %v51 = vld [vmem:[%s1 + $0x78] sm:$0xff]
    %v52 = vld [vmem:[%s2] sm:$0x1]
    %v53 = vld [vmem:[%s3] sm:$0x1]
    %v54 = vld [vmem:[%s4] sm:$0xff]
    %v55 = vld [vmem:[%s4 + $0x8] sm:$0xff]
    %v56 = vld [vmem:[%s4 + $0x10] sm:$0xff]
    %v57 = vld [vmem:[%s4 + $0x18] sm:$0xff]
    %v58 = vld [vmem:[%s4 + $0x20] sm:$0xff]
    %v59 = vld [vmem:[%s4 + $0x28] sm:$0xff]
    %v60 = vld [vmem:[%s4 + $0x30] sm:$0xff]
    %v61 = vld [vmem:[%s4 + $0x38] sm:$0xff]
    %v62 = vld [vmem:[%s5] sm:$0x1]
    %v63 = vld [vmem:[%s6] sm:$0xff]
    %v64 = vld [vmem:[%s6 + $0x8] sm:$0xff]
    %v65 = vld [vmem:[%s6 + $0x10] sm:$0xff]
    %v66 = vld [vmem:[%s6 + $0x18] sm:$0xff]
    %v67 = vld [vmem:[%s6 + $0x20] sm:$0xff]
    %v68 = vld [vmem:[%s6 + $0x28] sm:$0xff]
    %v69 = vld [vmem:[%s6 + $0x30] sm:$0xff]
    %v70 = vld [vmem:[%s6 + $0x38] sm:$0xff]
    %v71 = vld [vmem:[%s7] sm:$0x1]
    %v72 = vld [vmem:[%s8] sm:$0xff]
    %v73 = vld [vmem:[%s8 + $0x8] sm:$0xff]
    %v74 = vld [vmem:[%s8 + $0x10] sm:$0xff]
    %v75 = vld [vmem:[%s8 + $0x18] sm:$0xff]
    %v76 = vld [vmem:[%s9] sm:$0x1]
    %s77 = smul.u32 0, 2
    %s78 = smul.addr %s77, 2
    %s79 = scalar_lea.vmem %s0, %s78
    %v80 = vld [vmem:[%s79] sm:$0x3]
    %v81 = vld [vmem:[%s79 + $0x2] sm:$0x3]
    %83 = vset.pattern.permute.xlu0 0
    %84 = vperm.xlu0 %83, %v81
    %v85 = vpop.permute.xlu0 %84
    %v88 = vunpack.c.l.s4 269488144
    %v89 = vunpack.c.0.s8 %v88
    %v90 = vlaneseq
    %v91 = vshrl.u32 %v90, 7
    %v92 = vsub.s32 %v89, %v91
    %v93 = vrot.slane %v85, %v92
    %v95 = vlaneseq
    %v96 = vshrl.u32 %v95, 7
    %v97 = vsub.s32 0, %v96
    %v98 = vrot.slane %v52, %v97
    %v100 = vmul.f32 %v93, %v98
    %101 = vmatprep.subr.mxu0 0.0
    %102 = vmatpush1.msra.mxu0 %v36
    %103 = vmatprep.subr.mxu0 0.0
    %104 = vmatpush1.msra.mxu0 %v37
    %105 = vmatprep.subr.mxu0 0.0
    %106 = vmatpush1.msra.mxu0 %v38
    %107 = vmatprep.subr.mxu0 0.0
    %108 = vmatpush1.msra.mxu0 %v39
    %109 = vmatprep.subr.mxu0 0.0
    %110 = vmatpush1.msra.mxu0 %v40
    %111 = vmatprep.subr.mxu0 0.0
    %112 = vmatpush1.msra.mxu0 %v41
    %113 = vmatprep.subr.mxu0 0.0
    %114 = vmatpush1.msra.mxu0 %v42
    %115 = vmatprep.subr.mxu0 0.0
    %116 = vmatpush1.msra.mxu0 %v43
    %117 = vmatprep.subr.mxu0 0.0
    %118 = vmatpush1.msra.mxu0 %v44
    %119 = vmatprep.subr.mxu0 0.0
    %120 = vmatpush1.msra.mxu0 %v45
    %121 = vmatprep.subr.mxu0 0.0
    %122 = vmatpush1.msra.mxu0 %v46
    %123 = vmatprep.subr.mxu0 0.0
    %124 = vmatpush1.msra.mxu0 %v47
    %125 = vmatprep.subr.mxu0 0.0
    %126 = vmatpush1.msra.mxu0 %v48
    %127 = vmatprep.subr.mxu0 0.0
    %128 = vmatpush1.msra.mxu0 %v49
    %129 = vmatprep.subr.mxu0 0.0
    %130 = vmatpush1.msra.mxu0 %v50
    %131 = vmatprep.subr.mxu0 0.0
    %132 = vmatpush1.msra.mxu0 %v51
    %133 = vmatprep.subr.mxu0 0.0
    %134 = vmatpush1.msra.mxu0 0.0
    %135 = vmatprep.subr.mxu0 0.0
    %136 = vmatpush1.msra.mxu0 0.0
    %137 = vmatprep.subr.mxu0 0.0
    %138 = vmatpush1.msra.mxu0 0.0
    %139 = vmatprep.subr.mxu0 0.0
    %140 = vmatpush1.msra.mxu0 0.0
    %141 = vmatprep.subr.mxu0 0.0
    %142 = vmatpush1.msra.mxu0 0.0
    %143 = vmatprep.subr.mxu0 0.0
    %144 = vmatpush1.msra.mxu0 0.0
    %145 = vmatprep.subr.mxu0 0.0
    %146 = vmatpush1.msra.mxu0 0.0
    %147 = vmatprep.subr.mxu0 0.0
    %148 = vmatpush1.msra.mxu0 0.0
    %149 = vmatprep.subr.mxu0 0.0
    %150 = vmatpush1.msra.mxu0 0.0
    %151 = vmatprep.subr.mxu0 0.0
    %152 = vmatpush1.msra.mxu0 0.0
    %153 = vmatprep.subr.mxu0 0.0
    %154 = vmatpush1.msra.mxu0 0.0
    %155 = vmatprep.subr.mxu0 0.0
    %156 = vmatpush1.msra.mxu0 0.0
    %157 = vmatprep.subr.mxu0 0.0
    %158 = vmatpush1.msra.mxu0 0.0
    %159 = vmatprep.subr.mxu0 0.0
    %160 = vmatpush1.msra.mxu0 0.0
    %161 = vmatprep.subr.mxu0 0.0
    %162 = vmatpush1.msra.mxu0 0.0
    %163 = vmatprep.subr.mxu0 0.0
    %164 = vmatpush1.msra.mxu0 0.0
    %165 = vmatprep.mubr.f32.mxu0 0.0
    %166 = vmatmul.mubr.f32.gmra.mrb[0].mxu0 %v80
    %v167 = vpop.f32.mrb[0].mxu0
    %v168 = vadd.f32 %v100, %v167
    %v169 = vpop.f32.mrb[0].mxu0
    %170 = vdwg.mxu0
    %v172 = vlaneseq
    %v173 = vshrl.u32 %v172, 7
    %v174 = vsub.s32 0, %v173
    %v175 = vrot.slane %v53, %v174
    %v177 = vadd.f32 %v168, %v175
    %v178 = vmax.f32 %v177, 0.0
    %v180 = vlaneseq
    %v181 = vshrl.u32 %v180, 7
    %v182 = vsub.s32 0, %v181
    %v183 = vrot.slane %v62, %v182
    %vm185 = vcmask 523264
    %v187 = vsel %vm185, %v178, 0
    %189 = vmatprep.subr.mxu0 0.0
    %190 = vmatpush1.msra.mxu0 %v54
    %191 = vmatprep.subr.mxu0 0.0
    %192 = vmatpush1.msra.mxu0 %v55
    %193 = vmatprep.subr.mxu0 0.0
    %194 = vmatpush1.msra.mxu0 %v56
    %195 = vmatprep.subr.mxu0 0.0
    %196 = vmatpush1.msra.mxu0 %v57
    %197 = vmatprep.subr.mxu0 0.0
    %198 = vmatpush1.msra.mxu0 %v58
    %199 = vmatprep.subr.mxu0 0.0
    %200 = vmatpush1.msra.mxu0 %v59
    %201 = vmatprep.subr.mxu0 0.0
    %202 = vmatpush1.msra.mxu0 %v60
    %203 = vmatprep.subr.mxu0 0.0
    %204 = vmatpush1.msra.mxu0 %v61
    %205 = vmatprep.subr.mxu0 0.0
    %206 = vmatpush1.msra.mxu0 0.0
    %207 = vmatprep.subr.mxu0 0.0
    %208 = vmatpush1.msra.mxu0 0.0
    %209 = vmatprep.subr.mxu0 0.0
    %210 = vmatpush1.msra.mxu0 0.0
    %211 = vmatprep.subr.mxu0 0.0
    %212 = vmatpush1.msra.mxu0 0.0
    %213 = vmatprep.subr.mxu0 0.0
    %214 = vmatpush1.msra.mxu0 0.0
    %215 = vmatprep.subr.mxu0 0.0
    %216 = vmatpush1.msra.mxu0 0.0
    %217 = vmatprep.subr.mxu0 0.0
    %218 = vmatpush1.msra.mxu0 0.0
    %219 = vmatprep.subr.mxu0 0.0
    %220 = vmatpush1.msra.mxu0 0.0
    %221 = vmatprep.subr.mxu0 0.0
    %222 = vmatpush1.msra.mxu0 0.0
    %223 = vmatprep.subr.mxu0 0.0
    %224 = vmatpush1.msra.mxu0 0.0
    %225 = vmatprep.subr.mxu0 0.0
    %226 = vmatpush1.msra.mxu0 0.0
    %227 = vmatprep.subr.mxu0 0.0
    %228 = vmatpush1.msra.mxu0 0.0
    %229 = vmatprep.subr.mxu0 0.0
    %230 = vmatpush1.msra.mxu0 0.0
    %231 = vmatprep.subr.mxu0 0.0
    %232 = vmatpush1.msra.mxu0 0.0
    %233 = vmatprep.subr.mxu0 0.0
    %234 = vmatpush1.msra.mxu0 0.0
    %235 = vmatprep.subr.mxu0 0.0
    %236 = vmatpush1.msra.mxu0 0.0
    %237 = vmatprep.subr.mxu0 0.0
    %238 = vmatpush1.msra.mxu0 0.0
    %239 = vmatprep.subr.mxu0 0.0
    %240 = vmatpush1.msra.mxu0 0.0
    %241 = vmatprep.subr.mxu0 0.0
    %242 = vmatpush1.msra.mxu0 0.0
    %243 = vmatprep.subr.mxu0 0.0
    %244 = vmatpush1.msra.mxu0 0.0
    %245 = vmatprep.subr.mxu0 0.0
    %246 = vmatpush1.msra.mxu0 0.0
    %247 = vmatprep.subr.mxu0 0.0
    %248 = vmatpush1.msra.mxu0 0.0
    %249 = vmatprep.subr.mxu0 0.0
    %250 = vmatpush1.msra.mxu0 0.0
    %251 = vmatprep.subr.mxu0 0.0
    %252 = vmatpush1.msra.mxu0 0.0
    %253 = vmatprep.mubr.f32.mxu0 0.0
    %254 = vmatmul.mubr.f32.gmra.mrb[0].mxu0 %v187
    %v255 = vpop.f32.mrb[0].mxu0
    %v256 = vadd.f32 %v183, %v255
    %v257 = vpop.f32.mrb[0].mxu0
    %258 = vdwg.mxu0
    %v259 = vmax.f32 %v256, 0.0
    %v261 = vlaneseq
    %v262 = vshrl.u32 %v261, 7
    %v263 = vsub.s32 0, %v262
    %v264 = vrot.slane %v71, %v263
    %v267 = vsel %vm185, %v259, 0
    %269 = vmatprep.subr.mxu0 0.0
    %270 = vmatpush1.msra.mxu0 %v63
    %271 = vmatprep.subr.mxu0 0.0
    %272 = vmatpush1.msra.mxu0 %v64
    %273 = vmatprep.subr.mxu0 0.0
    %274 = vmatpush1.msra.mxu0 %v65
    %275 = vmatprep.subr.mxu0 0.0
    %276 = vmatpush1.msra.mxu0 %v66
    %277 = vmatprep.subr.mxu0 0.0
    %278 = vmatpush1.msra.mxu0 %v67
    %279 = vmatprep.subr.mxu0 0.0
    %280 = vmatpush1.msra.mxu0 %v68
    %281 = vmatprep.subr.mxu0 0.0
    %282 = vmatpush1.msra.mxu0 %v69
    %283 = vmatprep.subr.mxu0 0.0
    %284 = vmatpush1.msra.mxu0 %v70
    %285 = vmatprep.subr.mxu0 0.0
    %286 = vmatpush1.msra.mxu0 0.0
    %287 = vmatprep.subr.mxu0 0.0
    %288 = vmatpush1.msra.mxu0 0.0
    %289 = vmatprep.subr.mxu0 0.0
    %290 = vmatpush1.msra.mxu0 0.0
    %291 = vmatprep.subr.mxu0 0.0
    %292 = vmatpush1.msra.mxu0 0.0
    %293 = vmatprep.subr.mxu0 0.0
    %294 = vmatpush1.msra.mxu0 0.0
    %295 = vmatprep.subr.mxu0 0.0
    %296 = vmatpush1.msra.mxu0 0.0
    %297 = vmatprep.subr.mxu0 0.0
    %298 = vmatpush1.msra.mxu0 0.0
    %299 = vmatprep.subr.mxu0 0.0
    %300 = vmatpush1.msra.mxu0 0.0
    %301 = vmatprep.subr.mxu0 0.0
    %302 = vmatpush1.msra.mxu0 0.0
    %303 = vmatprep.subr.mxu0 0.0
    %304 = vmatpush1.msra.mxu0 0.0
    %305 = vmatprep.subr.mxu0 0.0
    %306 = vmatpush1.msra.mxu0 0.0
    %307 = vmatprep.subr.mxu0 0.0
    %308 = vmatpush1.msra.mxu0 0.0
    %309 = vmatprep.subr.mxu0 0.0
    %310 = vmatpush1.msra.mxu0 0.0
    %311 = vmatprep.subr.mxu0 0.0
    %312 = vmatpush1.msra.mxu0 0.0
    %313 = vmatprep.subr.mxu0 0.0
    %314 = vmatpush1.msra.mxu0 0.0
    %315 = vmatprep.subr.mxu0 0.0
    %316 = vmatpush1.msra.mxu0 0.0
    %317 = vmatprep.subr.mxu0 0.0
    %318 = vmatpush1.msra.mxu0 0.0
    %319 = vmatprep.subr.mxu0 0.0
    %320 = vmatpush1.msra.mxu0 0.0
    %321 = vmatprep.subr.mxu0 0.0
    %322 = vmatpush1.msra.mxu0 0.0
    %323 = vmatprep.subr.mxu0 0.0
    %324 = vmatpush1.msra.mxu0 0.0
    %325 = vmatprep.subr.mxu0 0.0
    %326 = vmatpush1.msra.mxu0 0.0
    %327 = vmatprep.subr.mxu0 0.0
    %328 = vmatpush1.msra.mxu0 0.0
    %329 = vmatprep.subr.mxu0 0.0
    %330 = vmatpush1.msra.mxu0 0.0
    %331 = vmatprep.subr.mxu0 0.0
    %332 = vmatpush1.msra.mxu0 0.0
    %333 = vmatprep.mubr.f32.mxu0 0.0
    %334 = vmatmul.mubr.f32.gmra.mrb[0].mxu0 %v267
    %v335 = vpop.f32.mrb[0].mxu0
    %v336 = vadd.f32 %v264, %v335
    %v337 = vpop.f32.mrb[0].mxu0
    %338 = vdwg.mxu0
    %v339 = vmax.f32 %v336, 0.0
    %v341 = vlaneseq
    %v342 = vshrl.u32 %v341, 7
    %v343 = vsub.s32 0, %v342
    %v344 = vrot.slane %v76, %v343
    %vm346 = vcmask 261120
    %v348 = vsel %vm346, %v339, 0
    %350 = vmatprep.subr.mxu0 0.0
    %351 = vmatpush1.msra.mxu0 %v72
    %352 = vmatprep.subr.mxu0 0.0
    %353 = vmatpush1.msra.mxu0 %v73
    %354 = vmatprep.subr.mxu0 0.0
    %355 = vmatpush1.msra.mxu0 %v74
    %356 = vmatprep.subr.mxu0 0.0
    %357 = vmatpush1.msra.mxu0 %v75
    %358 = vmatprep.subr.mxu0 0.0
    %359 = vmatpush1.msra.mxu0 0.0
    %360 = vmatprep.subr.mxu0 0.0
    %361 = vmatpush1.msra.mxu0 0.0
    %362 = vmatprep.subr.mxu0 0.0
    %363 = vmatpush1.msra.mxu0 0.0
    %364 = vmatprep.subr.mxu0 0.0
    %365 = vmatpush1.msra.mxu0 0.0
    %366 = vmatprep.subr.mxu0 0.0
    %367 = vmatpush1.msra.mxu0 0.0
    %368 = vmatprep.subr.mxu0 0.0
    %369 = vmatpush1.msra.mxu0 0.0
    %370 = vmatprep.subr.mxu0 0.0
    %371 = vmatpush1.msra.mxu0 0.0
    %372 = vmatprep.subr.mxu0 0.0
    %373 = vmatpush1.msra.mxu0 0.0
    %374 = vmatprep.subr.mxu0 0.0
    %375 = vmatpush1.msra.mxu0 0.0
    %376 = vmatprep.subr.mxu0 0.0
    %377 = vmatpush1.msra.mxu0 0.0
    %378 = vmatprep.subr.mxu0 0.0
    %379 = vmatpush1.msra.mxu0 0.0
    %380 = vmatprep.subr.mxu0 0.0
    %381 = vmatpush1.msra.mxu0 0.0
    %382 = vmatprep.subr.mxu0 0.0
    %383 = vmatpush1.msra.mxu0 0.0
    %384 = vmatprep.subr.mxu0 0.0
    %385 = vmatpush1.msra.mxu0 0.0
    %386 = vmatprep.subr.mxu0 0.0
    %387 = vmatpush1.msra.mxu0 0.0
    %388 = vmatprep.subr.mxu0 0.0
    %389 = vmatpush1.msra.mxu0 0.0
    %390 = vmatprep.subr.mxu0 0.0
    %391 = vmatpush1.msra.mxu0 0.0
    %392 = vmatprep.subr.mxu0 0.0
    %393 = vmatpush1.msra.mxu0 0.0
    %394 = vmatprep.subr.mxu0 0.0
    %395 = vmatpush1.msra.mxu0 0.0
    %396 = vmatprep.subr.mxu0 0.0
    %397 = vmatpush1.msra.mxu0 0.0
    %398 = vmatprep.subr.mxu0 0.0
    %399 = vmatpush1.msra.mxu0 0.0
    %400 = vmatprep.subr.mxu0 0.0
    %401 = vmatpush1.msra.mxu0 0.0
    %402 = vmatprep.subr.mxu0 0.0
    %403 = vmatpush1.msra.mxu0 0.0
    %404 = vmatprep.subr.mxu0 0.0
    %405 = vmatpush1.msra.mxu0 0.0
    %406 = vmatprep.subr.mxu0 0.0
    %407 = vmatpush1.msra.mxu0 0.0
    %408 = vmatprep.subr.mxu0 0.0
    %409 = vmatpush1.msra.mxu0 0.0
    %410 = vmatprep.subr.mxu0 0.0
    %411 = vmatpush1.msra.mxu0 0.0
    %412 = vmatprep.subr.mxu0 0.0
    %413 = vmatpush1.msra.mxu0 0.0
    %414 = vmatprep.mubr.f32.mxu0 0.0
    %415 = vmatmul.mubr.f32.gmra.mrb[0].mxu0 %v348
    %v416 = vpop.f32.mrb[0].mxu0
    %v417 = vadd.f32 %v344, %v416
    %v418 = vpop.f32.mrb[0].mxu0
    %419 = vdwg.mxu0
    %vm420 = vcmask 123904
    %421 = vst.msk [vmem:[#allocation2] sm:$0x3] %vm420, %v417
    // Predicated region
    $region42: #{tpu_custom_call.1} parent=1 // pred_check
      _
    $region43: #{tpu_custom_call.1} parent=1 // pred_check_branch
      %423 = sbr.rel (0) target = $region45
    $region44: #{tpu_custom_call.1} parent=1 // pred_region
      %s425 = ssub.s32 32, 32
      %426 = vsyncadd [#allocation3], %s425
      %s428 = sshll.u32 [#allocation2], 4
      %s429 = int_to_ptr.vmem [resolvable:$true] %s428
      %431 = dma.vmem_to_hbm [thread:$0]  %s429, 32, %s10, [#allocation3]
    $region45: #{tpu_custom_call.1} parent=1 // pred_fallthru
      _
    // Predicated region
    $region46: #{tpu_custom_call.1} parent=1 // pred_check
      _
    $region47: #{tpu_custom_call.1} parent=1 // pred_check_branch
      %433 = sbr.rel (0) target = $region49
    $region48: #{tpu_custom_call.1} parent=1 // pred_region
      %434 = dma.done [#allocation3], 32
    $region49: #{tpu_custom_call.1} parent=1 // pred_fallthru
      _
    %435 = vsyncpa [#allocation3], 1

</llo_original>
